<compile_context>
chip_gen: v7x
topology: tpu7x:2x2x1
jax: 0.10.0
libtpu: 0.0.40
codegen_flags: <defaults>
</compile_context>

<pallas_src>
import functools
import numpy as np

import jax
import jax.numpy as jnp
from jax import lax
from jax.experimental import pallas as pl
from jax.experimental.pallas import tpu as pltpu

# Explicit VMEM budget (bytes): under every generation's scoped default and
# well under v7x's 64 MiB physical VMEM.
VMEM_LIMIT = 32 * 1024 * 1024

NEG_BIG = -1e30   # finite "-inf" so exp(m_old - m_new) never produces NaN


def _round_up(n, m):
    return ((n + m - 1) // m) * m


# ------------------------------ linear (fc) -------------------------------- #

def _linear_vpu_kernel(x_ref, wt_ref, b_ref, o_ref):
    # M == 1 path: VPU multiply + lane reduce (avoid a 1-output-lane MXU matmul).
    o_ref[...] = (jnp.sum(x_ref[...] * wt_ref[...], axis=-1, keepdims=True)
                  + b_ref[...])


def _linear_mxu_kernel(x_ref, w_ref, b_ref, o_ref):
    # General path: bf16 MXU operands, f32 accumulation, bias added once per tile.
    o_ref[...] = (jnp.dot(x_ref[...].astype(jnp.bfloat16),
                          w_ref[...].astype(jnp.bfloat16),
                          preferred_element_type=jnp.float32)
                  + b_ref[...])


def linear(x, w, b, *, tm=256):
    """Row-tiled dense layer. x:(N,K), w:(K,M), b:(1,M) -> (N,M) f32."""
    x = jnp.asarray(x, jnp.float32)
    w = jnp.asarray(w, jnp.float32)
    b = jnp.asarray(b, jnp.float32).reshape(1, -1)
    N, K = x.shape
    M = w.shape[1]
    if N <= tm:
        tm_eff, n_pad = N, N                     # single full block
    else:
        tm_eff = tm
        n_pad = _round_up(N, tm)
        x = jnp.pad(x, ((0, n_pad - N), (0, 0)))
    grid = (n_pad // tm_eff,)

    if M == 1:
        kernel, w_in = _linear_vpu_kernel, w.reshape(1, K)
        w_spec = pl.BlockSpec((1, K), lambda i: (0, 0))
    else:
        kernel, w_in = _linear_mxu_kernel, w
        w_spec = pl.BlockSpec((K, M), lambda i: (0, 0))

    out = pl.pallas_call(
        kernel,
        out_shape=jax.ShapeDtypeStruct((n_pad, M), jnp.float32),
        grid=grid,
        in_specs=[pl.BlockSpec((tm_eff, K), lambda i: (i, 0)),
                  w_spec,
                  pl.BlockSpec((1, M), lambda i: (0, 0))],
        out_specs=pl.BlockSpec((tm_eff, M), lambda i: (i, 0)),
        compiler_params=pltpu.CompilerParams(
            dimension_semantics=("parallel",),   # row tiles shard across TCs (v7x)
            vmem_limit_bytes=VMEM_LIMIT),
    )(x, w_in, b)
    return out[:N]


# --------------- segment sum (global_add_pool / cluster pool) --------------- #

def _segment_sum_kernel(seg_ref, z_ref, scale_ref, o_ref, acc_ref, *, num_segments):
    k = pl.program_id(0)

    @pl.when(k == 0)
    def _init():
        acc_ref[...] = jnp.zeros_like(acc_ref)

    seg = seg_ref[...]                                              # (1, tn) int32
    rows = lax.broadcasted_iota(jnp.int32, (num_segments, seg.shape[1]), 0)
    onehot = (rows == seg).astype(jnp.bfloat16)                     # (G, tn), exact 0/1
    acc_ref[...] += jnp.dot(onehot, z_ref[...].astype(jnp.bfloat16),
                            preferred_element_type=jnp.float32)

    @pl.when(k == pl.num_programs(0) - 1)
    def _fin():
        # fused per-segment scaling (cluster edge score; ones for global pool)
        o_ref[...] = acc_ref[...] * scale_ref[...]


def segment_sum(z, seg, num_segments, scale=None, *, tn=512):
    """Scatter-add rows of z into buckets via one-hot bf16 matmul, then scale."""
    z = jnp.asarray(z, jnp.float32)
    N, D = z.shape
    seg = jnp.asarray(seg, jnp.int32)
    G = int(num_segments)
    if scale is None:
        scale = jnp.ones((G, 1), jnp.float32)
    else:
        scale = jnp.asarray(scale, jnp.float32).reshape(G, 1)
    if N <= tn:
        tn_eff, n_pad = N, N
    else:
        tn_eff = tn
        n_pad = _round_up(N, tn)
        z = jnp.pad(z, ((0, n_pad - N), (0, 0)))
        seg = jnp.pad(seg, (0, n_pad - N), constant_values=-1)      # -1: no bucket
    seg2 = seg.reshape(1, n_pad)
    grid = (n_pad // tn_eff,)

    return pl.pallas_call(
        functools.partial(_segment_sum_kernel, num_segments=G),
        out_shape=jax.ShapeDtypeStruct((G, D), jnp.float32),
        grid=grid,
        in_specs=[pl.BlockSpec((1, tn_eff), lambda k: (0, k)),
                  pl.BlockSpec((tn_eff, D), lambda k: (k, 0)),
                  pl.BlockSpec((G, 1), lambda k: (0, 0))],
        out_specs=pl.BlockSpec((G, D), lambda k: (0, 0)),
        scratch_shapes=[pltpu.VMEM((G, D), jnp.float32)],
        compiler_params=pltpu.CompilerParams(
            dimension_semantics=("arbitrary",),   # reduction over node tiles
            vmem_limit_bytes=VMEM_LIMIT),
    )(seg2, z, scale)


# --------- fused edge score (decomposed) + segment softmax (online) --------- #

def _edge_stats_kernel(src_ref, tgt_ref, x_ref, w2t_ref, b_ref,
                       raw_ref, m_ref, invl_ref,
                       ssrc_ref, stgt_ref, m_s, l_s, *, num_nodes):
    """Per edge-tile: raw scores (lane-dense) + online per-target max/sum."""
    k = pl.program_id(0)

    @pl.when(k == 0)
    def _init():
        x = x_ref[...]                                                   # (N, D) f32
        # per-node scores on the VPU (no (E,2D) concat / M=1 MXU matmul)
        ssrc_ref[...] = jnp.sum(x * w2t_ref[0:1, :], axis=-1, keepdims=True)
        stgt_ref[...] = jnp.sum(x * w2t_ref[1:2, :], axis=-1, keepdims=True)
        m_s[...] = jnp.full_like(m_s, NEG_BIG)
        l_s[...] = jnp.zeros_like(l_s)

    src = src_ref[...]                                                   # (1, tE)
    tgt = tgt_ref[...]                                                   # (1, tE)
    te = src.shape[1]
    node_ids = lax.broadcasted_iota(jnp.int32, (num_nodes, te), 0)       # (N, tE)
    src_mask = node_ids == src
    tgt_mask = node_ids == tgt

    # gather node scores onto edges (padded edges have src/tgt == -1 -> zero)
    raw_src = jnp.sum(jnp.where(src_mask, ssrc_ref[...], 0.0), axis=0, keepdims=True)
    raw_tgt = jnp.sum(jnp.where(tgt_mask, stgt_ref[...], 0.0), axis=0, keepdims=True)
    raw = raw_src + raw_tgt + b_ref[...]                                 # (1, tE)
    raw_ref[...] = raw                                                   # lane-dense store

    # flash-style online per-target-node max / sum update
    tile_max = jnp.max(jnp.where(tgt_mask, raw, NEG_BIG), axis=1, keepdims=True)
    m_old = m_s[...]
    m_new = jnp.maximum(m_old, tile_max)
    p = jnp.where(tgt_mask, jnp.exp(raw - m_new), 0.0)                   # (N, tE)
    l_s[...] = l_s[...] * jnp.exp(m_old - m_new) + jnp.sum(p, axis=1, keepdims=True)
    m_s[...] = m_new

    @pl.when(k == pl.num_programs(0) - 1)
    def _fin():
        m_ref[...] = m_s[...]
        # reciprocal once per node (matches PyG softmax's +1e-16 denominator)
        invl_ref[...] = 1.0 / (l_s[...] + jnp.float32(1e-16))


def _edge_softmax_kernel(tgt_ref, raw_ref, m_ref, invl_ref, out_ref, *, num_nodes):
    """out[e] = exp(raw[e] - m[tgt[e]]) * invl[tgt[e]]; padded edges -> 0."""
    tgt = tgt_ref[...]
    te = tgt.shape[1]
    node_ids = lax.broadcasted_iota(jnp.int32, (num_nodes, te), 0)
    tgt_mask = node_ids == tgt
    m_e = jnp.sum(jnp.where(tgt_mask, m_ref[...], 0.0), axis=0, keepdims=True)
    invl_e = jnp.sum(jnp.where(tgt_mask, invl_ref[...], 0.0), axis=0, keepdims=True)
    out = jnp.exp(raw_ref[...] - m_e) * invl_e
    out_ref[...] = jnp.where(tgt >= 0, out, 0.0)


def edge_score_softmax(x, w, b, src_np, tgt_np, num_nodes, *, te=512):
    """softmax(lin(cat(x[src], x[tgt])), index=tgt) via decomposed node scores."""
    x = jnp.asarray(x, jnp.float32)
    N, D = x.shape
    E = int(src_np.shape[0])
    # adaptive lane-dense edge tile: up to `te`, never larger than padded E
    te_eff = min(te, _round_up(max(E, 1), 128))
    e_pad = _round_up(max(E, 1), te_eff)
    src = np.full(e_pad, -1, np.int32); src[:E] = src_np
    tgt = np.full(e_pad, -1, np.int32); tgt[:E] = tgt_np
    src = jnp.asarray(src).reshape(1, e_pad)
    tgt = jnp.asarray(tgt).reshape(1, e_pad)
    w2t = jnp.asarray(w, jnp.float32).reshape(2, D)       # row0 = w_src, row1 = w_tgt
    bias = jnp.asarray(b, jnp.float32).reshape(1, 1)
    grid = (e_pad // te_eff,)
    edge_spec = pl.BlockSpec((1, te_eff), lambda k: (0, k))
    node_vec_spec = pl.BlockSpec((N, 1), lambda k: (0, 0))

    raw, m, invl = pl.pallas_call(
        functools.partial(_edge_stats_kernel, num_nodes=N),
        out_shape=(jax.ShapeDtypeStruct((1, e_pad), jnp.float32),
                   jax.ShapeDtypeStruct((N, 1), jnp.float32),
                   jax.ShapeDtypeStruct((N, 1), jnp.float32)),
        grid=grid,
        in_specs=[edge_spec, edge_spec,
                  pl.BlockSpec((N, D), lambda k: (0, 0)),
                  pl.BlockSpec((2, D), lambda k: (0, 0)),
                  pl.BlockSpec((1, 1), lambda k: (0, 0))],
        out_specs=(edge_spec, node_vec_spec, node_vec_spec),
        scratch_shapes=[pltpu.VMEM((N, 1), jnp.float32)] * 4,
        compiler_params=pltpu.CompilerParams(
            dimension_semantics=("arbitrary",),   # online reduction over edge tiles
            vmem_limit_bytes=VMEM_LIMIT),
    )(src, tgt, x, w2t, bias)

    soft = pl.pallas_call(
        functools.partial(_edge_softmax_kernel, num_nodes=N),
        out_shape=jax.ShapeDtypeStruct((1, e_pad), jnp.float32),
        grid=grid,
        in_specs=[edge_spec, edge_spec, node_vec_spec, node_vec_spec],
        out_specs=edge_spec,
        compiler_params=pltpu.CompilerParams(
            dimension_semantics=("parallel",),
            vmem_limit_bytes=VMEM_LIMIT),
    )(tgt, raw, m, invl)
    return soft[0, :E]


# --------------------- EdgePooling (host greedy merge) --------------------- #

def _greedy_merge(edge_index_np, edge_score_np, num_nodes):
    # TODO(synk): sequential data-dependent greedy edge contraction with dynamic
    # output sizes has no clean Pallas equivalent; executed on host in NumPy.
    order = np.argsort(-edge_score_np, kind="stable")
    cluster = -np.ones(num_nodes, dtype=np.int64)
    remaining = np.ones(num_nodes, dtype=bool)
    chosen = []
    i = 0
    for eidx in order:
        s = int(edge_index_np[0, eidx])
        if not remaining[s]:
            continue
        t = int(edge_index_np[1, eidx])
        if not remaining[t]:
            continue
        chosen.append(int(eidx))
        cluster[s] = i
        remaining[s] = False
        if s != t:
            cluster[t] = i
            remaining[t] = False
        i += 1
    for n in range(num_nodes):
        if remaining[n]:
            cluster[n] = i
            i += 1
    return cluster, np.array(chosen, dtype=np.int64), i


def edge_pooling_forward(x, edge_index_np, batch_np, lin_w, lin_b,
                         add_to_edge_score=0.5):
    """One EdgePooling layer. x: jnp (N,D); edge_index/batch: numpy."""
    N = x.shape[0]
    E = edge_index_np.shape[1]
    # merged edges must stay within a graph for the batch scatter below
    if E > 0:
        assert np.all(batch_np[edge_index_np[0]] == batch_np[edge_index_np[1]])

    if E > 0:
        src = edge_index_np[0].astype(np.int32)
        tgt = edge_index_np[1].astype(np.int32)
        score = edge_score_softmax(x, lin_w, lin_b, src, tgt, N) \
            + jnp.float32(add_to_edge_score)
        score_np = np.asarray(jax.device_get(score))
    else:
        score_np = np.zeros(0, np.float32)

    cluster, chosen, n_clusters = _greedy_merge(edge_index_np, score_np, N)

    # new node features = scatter_add(x, cluster) * cluster_score
    # (the per-cluster scale is fused into the segment_sum kernel's finalize)
    cluster_score = np.ones(n_clusters, dtype=np.float32)
    if len(chosen) > 0:
        # cluster id j was assigned to chosen[j] in order inside _greedy_merge
        cluster_score[:len(chosen)] = score_np[chosen]
    new_x = segment_sum(x, cluster, n_clusters, scale=cluster_score)

    # coalesce(cluster[edge_index]): dedupe + sort by (row, col); keep self-loops
    if E > 0:
        mapped = cluster[edge_index_np]
        keys = mapped[0] * n_clusters + mapped[1]
        uniq = np.unique(keys)
        new_edge_index = np.stack([uniq // n_clusters, uniq % n_clusters], axis=0)
    else:
        new_edge_index = np.zeros((2, 0), dtype=np.int64)

    new_batch = np.zeros(n_clusters, dtype=np.int64)
    new_batch[cluster] = batch_np
    return new_x, new_edge_index.astype(np.int64), new_batch


# ------------------------------ Full model --------------------------------- #

def init_params(key, in_dim=1, embed_dim=64, num_layers=2, num_class=1):
    ks = jax.random.split(key, 2 * num_layers + 3)
    params = {}
    params["embed_w"] = jax.random.normal(ks[0], (in_dim, embed_dim), jnp.float32)
    layers = []
    for i in range(num_layers):
        fan_in = 2 * embed_dim
        w = jax.random.normal(ks[1 + 2 * i], (fan_in, 1), jnp.float32) / np.sqrt(fan_in)
        b = jax.random.normal(ks[2 + 2 * i], (1, 1), jnp.float32) / np.sqrt(fan_in)
        layers.append((w, b))
    params["layers"] = layers
    fan_in = embed_dim * (num_layers + 1)
    params["fc_w"] = jax.random.normal(ks[-2], (fan_in, num_class), jnp.float32) / np.sqrt(fan_in)
    params["fc_b"] = jax.random.normal(ks[-1], (1, num_class), jnp.float32) / np.sqrt(fan_in)
    return params


def edgepool_forward(params, x_idx_np, edge_index_np, batch_np, num_graphs):
    # node_embed: Embedding lookup == row gather; with in_dim == 1 it is a pure
    # broadcast, so no K=1 matmul kernel is used.
    z = jnp.take(params["embed_w"], jnp.asarray(x_idx_np, jnp.int32), axis=0)

    embs = [segment_sum(z, batch_np, num_graphs)]            # global_add_pool (Pallas)
    ei, b = edge_index_np, batch_np
    for (lw, lb) in params["layers"]:
        z, ei, b = edge_pooling_forward(z, ei, b, lw, lb)
        embs.append(segment_sum(z, b, num_graphs))
    Z = jnp.concatenate(embs, axis=1)                        # (G, embed_dim*(L+1))
    return linear(Z, params["fc_w"], params["fc_b"])         # final fc (Pallas)


# --------------------------------- main ------------------------------------ #

if __name__ == "__main__":
    in_dim, embed_dim, num_layers, num_class = 1, 64, 2, 1
    nodes_per_graph, num_graphs = 8, 2
    N = nodes_per_graph * num_graphs

    # x: node "type" indices (all zeros, since Embedding(1, D))
    x_idx = np.zeros(N, dtype=np.int64)
    # bidirectional ring edges within each graph
    rows, cols = [], []
    for g in range(num_graphs):
        off = g * nodes_per_graph
        for i in range(nodes_per_graph):
            j = (i + 1) % nodes_per_graph
            rows += [off + i, off + j]
            cols += [off + j, off + i]
    edge_index = np.stack([np.array(rows), np.array(cols)], axis=0).astype(np.int64)  # (2, 32)
    batch = np.repeat(np.arange(num_graphs), nodes_per_graph).astype(np.int64)        # (16,)

    params = init_params(jax.random.PRNGKey(0), in_dim, embed_dim, num_layers, num_class)

    out = edgepool_forward(params, x_idx, edge_index, batch, num_graphs)
    out = jax.block_until_ready(out)
    assert out.shape == (num_graphs, num_class), out.shape
    assert bool(jnp.all(jnp.isfinite(out)))
    print("KERNEL_OK")
</pallas_src>

<mosaic_0001>
module attributes {stable_mosaic.version = 11 : i64} {
  func.func @_segment_sum_kernel(%arg0: i32, %arg1: memref<1x16xi32, #tpu.memory_space<vmem>>, %arg2: memref<16x64xf32, #tpu.memory_space<vmem>>, %arg3: memref<2x1xf32, #tpu.memory_space<vmem>>, %arg4: memref<2x64xf32, #tpu.memory_space<vmem>>, %arg5: memref<2x64xf32, #tpu.memory_space<vmem>>) attributes {dimension_semantics = [#tpu.dimension_semantics<arbitrary>], iteration_bounds = array<i64: 1>, scalar_prefetch = 0 : i64, scratch_operands = 1 : i64, tpu.core_type = #tpu.core_type<tc>, window_params = [{transform_indices = @transform_0, window_bounds = array<i64: 1, 16>}, {transform_indices = @transform_1, window_bounds = array<i64: 16, 64>}, {pipeline_mode = #tpu.pipeline_mode<synchronous>, transform_indices = @transform_2, window_bounds = array<i64: 2, 1>}, {pipeline_mode = #tpu.pipeline_mode<synchronous>, transform_indices = @transform_3, window_bounds = array<i64: 2, 64>}]} {
    %c0_i32 = arith.constant 0 : i32
    %0 = arith.cmpi eq, %arg0, %c0_i32 : i32
    %1 = arith.extui %0 : i1 to i32
    %c0_i32_0 = arith.constant 0 : i32
    %2 = arith.cmpi ne, %1, %c0_i32_0 : i32
    scf.if %2 {
      %cst_10 = arith.constant 0.000000e+00 : f32
      %19 = vector.broadcast %cst_10 : f32 to vector<2x64xf32>
      %c0_11 = arith.constant 0 : index
      %c0_12 = arith.constant 0 : index
      %20 = vector.load %arg5[%c0_11, %c0_12] : memref<2x64xf32, #tpu.memory_space<vmem>>, vector<2x64xf32>
      tpu.vector_store %arg5[%c0_11, %c0_12], %19 {strides = array<i32>} : memref<2x64xf32, #tpu.memory_space<vmem>>, vector<2x64xf32>,
    } else {
    }
    %c0 = arith.constant 0 : index
    %c0_1 = arith.constant 0 : index
    %3 = vector.load %arg1[%c0, %c0_1] : memref<1x16xi32, #tpu.memory_space<vmem>>, vector<1x16xi32>
    %4 = tpu.iota {dimensions = array<i32: 0>} : vector<2x16xi32>
    %5 = vector.broadcast %3 : vector<1x16xi32> to vector<2x16xi32>
    %6 = arith.cmpi eq, %4, %5 : vector<2x16xi32>
    %7 = arith.extui %6 : vector<2x16xi1> to vector<2x16xi32>
    %8 = arith.sitofp %7 : vector<2x16xi32> to vector<2x16xf32>
    %9 = arith.truncf %8 : vector<2x16xf32> to vector<2x16xbf16>
    %c0_2 = arith.constant 0 : index
    %c0_3 = arith.constant 0 : index
    %10 = vector.load %arg5[%c0_2, %c0_3] : memref<2x64xf32, #tpu.memory_space<vmem>>, vector<2x64xf32>
    %c0_4 = arith.constant 0 : index
    %c0_5 = arith.constant 0 : index
    %11 = vector.load %arg2[%c0_4, %c0_5] : memref<16x64xf32, #tpu.memory_space<vmem>>, vector<16x64xf32>
    %12 = arith.truncf %11 : vector<16x64xf32> to vector<16x64xbf16>
    %cst = arith.constant dense<0.000000e+00> : vector<2x64xf32>
    %13 = tpu.matmul %9, %12, %cst {dimension_numbers = #tpu.dot_dimension_numbers<[1], [0], [0], [1], [0, 0, 1, 1], [], []>} : vector<2x16xbf16>, vector<16x64xbf16>, vector<2x64xf32> -> vector<2x64xf32>
    %14 = arith.addf %10, %13 : vector<2x64xf32>
    %c0_6 = arith.constant 0 : index
    %c0_7 = arith.constant 0 : index
    %15 = vector.load %arg5[%c0_6, %c0_7] : memref<2x64xf32, #tpu.memory_space<vmem>>, vector<2x64xf32>
    tpu.vector_store %arg5[%c0_6, %c0_7], %14 {strides = array<i32>} : memref<2x64xf32, #tpu.memory_space<vmem>>, vector<2x64xf32>,
    %c0_i32_8 = arith.constant 0 : i32
    %16 = arith.cmpi eq, %arg0, %c0_i32_8 : i32
    %17 = arith.extui %16 : i1 to i32
    %c0_i32_9 = arith.constant 0 : i32
    %18 = arith.cmpi ne, %17, %c0_i32_9 : i32
    scf.if %18 {
      %c0_10 = arith.constant 0 : index
      %c0_11 = arith.constant 0 : index
      %19 = vector.load %arg5[%c0_10, %c0_11] : memref<2x64xf32, #tpu.memory_space<vmem>>, vector<2x64xf32>
      %c0_12 = arith.constant 0 : index
      %c0_13 = arith.constant 0 : index
      %20 = vector.load %arg3[%c0_12, %c0_13] : memref<2x1xf32, #tpu.memory_space<vmem>>, vector<2x1xf32>
      %21 = vector.broadcast %20 : vector<2x1xf32> to vector<2x64xf32>
      %22 = arith.mulf %19, %21 : vector<2x64xf32>
      %c0_14 = arith.constant 0 : index
      %c0_15 = arith.constant 0 : index
      %23 = vector.load %arg4[%c0_14, %c0_15] : memref<2x64xf32, #tpu.memory_space<vmem>>, vector<2x64xf32>
      tpu.vector_store %arg4[%c0_14, %c0_15], %22 {strides = array<i32>} : memref<2x64xf32, #tpu.memory_space<vmem>>, vector<2x64xf32>,
    } else {
    }
    return
  }
  func.func @transform_0(%arg0: i32) -> (i32, i32) {
    %c0_i32 = arith.constant 0 : i32
    %c0_i32_0 = arith.constant 0 : i32
    return %c0_i32, %arg0 : i32, i32
  }
  func.func @transform_1(%arg0: i32) -> (i32, i32) {
    %c0_i32 = arith.constant 0 : i32
    %c0_i32_0 = arith.constant 0 : i32
    return %arg0, %c0_i32 : i32, i32
  }
  func.func @transform_2(%arg0: i32) -> (i32, i32) {
    %c0_i32 = arith.constant 0 : i32
    %c0_i32_0 = arith.constant 0 : i32
    %c0_i32_1 = arith.constant 0 : i32
    return %c0_i32, %c0_i32_0 : i32, i32
  }
  func.func @transform_3(%arg0: i32) -> (i32, i32) {
    %c0_i32 = arith.constant 0 : i32
    %c0_i32_0 = arith.constant 0 : i32
    %c0_i32_1 = arith.constant 0 : i32
    return %c0_i32, %c0_i32_0 : i32, i32
  }
}

</mosaic_0001>

<llo_original>
// kernel: tpu_custom_call.1
$region0: #{tpu_custom_call.1}
  #allocation0 [shape = 'u32[]', space=smem, size = 0x4, offset = 0x4, fixed_abs, tag = 'smem constant byte address 0x4 - core index']
  #allocation1 [shape = 'u32[144,128]{1,0:T(1,128)}', space=vmem, size = 0x12000, scoped, tag = 'internal scratch']
  #allocation2 [shape = 'f32[2,64]{1,0:T(2,128)}', space=vmem, size = 0x400, scoped, tag = 'scratch operand']
  %s0 = inlined_call_operand.vmem [shape: s32[1,16], index: 0, kind: input, shape index: {}]
  %s1 = inlined_call_operand.hbm [shape: f32[16,64], index: 1, kind: input, shape index: {}]
  %s2 = inlined_call_operand.vmem [shape: f32[2,1], index: 2, kind: input, shape index: {}]
  %s3 = inlined_call_operand.hbm [shape: f32[2,64], index: 3, kind: output, shape index: {}]
  %s4 = sld [smem:[#allocation0]]
  $region34: #{tpu_custom_call.1} parent=0
    _
  %s6 = ssub.s32 1, %s4
  %s7 = scalar_select 0, %s6, %s4
  $region1: #{tpu_custom_call.1} parent=0
    #allocation3 [shape = 'u8[8192]{0}', space=vmem, size = 0x2000, scoped, tag = 'input window, operand 1, single buffered']
    #allocation4 [shape = 's32[1]{0}', space=sflag, size = 0x4, scoped, tag = 'scoped memory for tpu_custom_call.1']
    #allocation5 [shape = 's32[1]{0}', space=sflag, size = 0x4, scoped, tag = 'scoped memory for tpu_custom_call.1']
    #allocation6 [shape = 'u8[1024]{0}', space=vmem, size = 0x400, scoped, tag = 'output window, operand 0, single buffered']
    %8 = vsyncpa [#allocation4], 0
    %9 = vsyncpa [#allocation5], 0
    // Predicated region
    $region2: #{tpu_custom_call.1} parent=1 // pred_check
      _
    $region3: #{tpu_custom_call.1} parent=1 // pred_check_branch
      %11 = sbr.rel (0) target = $region5
    $region4: #{tpu_custom_call.1} parent=1 // pred_region
      _
    $region5: #{tpu_custom_call.1} parent=1 // pred_fallthru
      _
    // Predicated region
    $region6: #{tpu_custom_call.1} parent=1 // pred_check
      _
    $region7: #{tpu_custom_call.1} parent=1 // pred_check_branch
      %13 = sbr.rel (0) target = $region9
    $region8: #{tpu_custom_call.1} parent=1 // pred_region
      %s15 = ssub.s32 256, 256
      %16 = vsyncadd [#allocation4], %s15
      %s17 = sshll.u32 [#allocation3], 4
      %s18 = int_to_ptr.vmem [resolvable:$true] %s17
      %23 = dma.hbm_to_vmem [thread:$0]  %s1, 256, %s18, [#allocation4], 128, 128, 8
    $region9: #{tpu_custom_call.1} parent=1 // pred_fallthru
      _
    // Predicated region
    $region10: #{tpu_custom_call.1} parent=1 // pred_check
      _
    $region11: #{tpu_custom_call.1} parent=1 // pred_check_branch
      %25 = sbr.rel (0) target = $region13
    $region12: #{tpu_custom_call.1} parent=1 // pred_region
      _
    $region13: #{tpu_custom_call.1} parent=1 // pred_fallthru
      _
    // Predicated region
    $region14: #{tpu_custom_call.1} parent=1 // pred_check
      _
    $region15: #{tpu_custom_call.1} parent=1 // pred_check_branch
      %27 = sbr.rel (0) target = $region17
    $region16: #{tpu_custom_call.1} parent=1 // pred_region
      %28 = dma.done [#allocation4], 256
    $region17: #{tpu_custom_call.1} parent=1 // pred_fallthru
      _
    %p30 = scmp.eq.s32.totalorder 0, 0
    // Predicated region
    $region18: #{tpu_custom_call.1} parent=1 // pred_check
      %p31 = pneg %p30
    $region19: #{tpu_custom_call.1} parent=1 // pred_check_branch
      %33 = sbr.rel (%p31) target = $region21
    $region20: #{tpu_custom_call.1} parent=1 // pred_region
      %vm34 = vcmask 517120
      %35 = vst.msk [vmem:[#allocation2] sm:$0x3] %vm34, 0.0
    $region21: #{tpu_custom_call.1} parent=1 // pred_fallthru
      _
    %v36 = vld [vmem:[%s0] sm:$0x1]
    %v37 = vlaneseq
    %v38 = vshrl.u32 %v37, 7
    %v39 = vlaneseq
    %v40 = vshrl.u32 %v39, 7
    %v41 = vsub.s32 0, %v40
    %v42 = vrot.slane %v36, %v41
    %vm43 = vcmp.eq.s32.totalorder %v38, %v42
    %v44 = vsel %vm43, 1, 0
    %v45 = vcvt.s32.f32 %v44
    %v46 = vpack.c.bf16 %v45, %v45
    %v47 = vld [vmem:[#allocation2] sm:$0x3]
    %v48 = vld [vmem:[#allocation3] sm:$0xff]
    %v49 = vld [vmem:[#allocation3 + $0x8] sm:$0xff]
    %v50 = vpack.c.bf16 %v49, %v48
    %vm51 = vcmask 130048
    %v53 = vsel %vm51, %v46, 0
    %55 = vmatprep.subr.bf16.mxu0 0
    %56 = vmatpush1.bf16.msra.mxu0 %v50
    %57 = vmatprep.subr.bf16.mxu0 0
    %58 = vmatpush1.bf16.msra.mxu0 0
    %59 = vmatprep.subr.bf16.mxu0 0
    %60 = vmatpush1.bf16.msra.mxu0 0
    %61 = vmatprep.subr.bf16.mxu0 0
    %62 = vmatpush1.bf16.msra.mxu0 0
    %63 = vmatprep.subr.bf16.mxu0 0
    %64 = vmatpush1.bf16.msra.mxu0 0
    %65 = vmatprep.subr.bf16.mxu0 0
    %66 = vmatpush1.bf16.msra.mxu0 0
    %67 = vmatprep.subr.bf16.mxu0 0
    %68 = vmatpush1.bf16.msra.mxu0 0
    %69 = vmatprep.subr.bf16.mxu0 0
    %70 = vmatpush1.bf16.msra.mxu0 0
    %71 = vmatprep.subr.bf16.mxu0 0
    %72 = vmatpush1.bf16.msra.mxu0 0
    %73 = vmatprep.subr.bf16.mxu0 0
    %74 = vmatpush1.bf16.msra.mxu0 0
    %75 = vmatprep.subr.bf16.mxu0 0
    %76 = vmatpush1.bf16.msra.mxu0 0
    %77 = vmatprep.subr.bf16.mxu0 0
    %78 = vmatpush1.bf16.msra.mxu0 0
    %79 = vmatprep.subr.bf16.mxu0 0
    %80 = vmatpush1.bf16.msra.mxu0 0
    %81 = vmatprep.subr.bf16.mxu0 0
    %82 = vmatpush1.bf16.msra.mxu0 0
    %83 = vmatprep.subr.bf16.mxu0 0
    %84 = vmatpush1.bf16.msra.mxu0 0
    %85 = vmatprep.subr.bf16.mxu0 0
    %86 = vmatpush1.bf16.msra.mxu0 0
    %87 = vmatprep.mubr.bf16.mxu0 0
    %88 = vmatmul.mubr.bf16.gmra.mrb[0].mxu0 %v53
    %v89 = vpop.f32.mrb[0].mxu0
    %v90 = vadd.f32 0.0, %v89
    %v91 = vpop.f32.mrb[0].mxu0
    %v92 = vpop.f32.mrb[0].mxu0
    %v93 = vpop.f32.mrb[0].mxu0
    %94 = vdwg.mxu0
    %v95 = vadd.f32 %v47, %v90
    %vm96 = vcmask 517120
    %97 = vst.msk [vmem:[#allocation2] sm:$0x3] %vm96, %v95
    // Predicated region
    $region22: #{tpu_custom_call.1} parent=1 // pred_check
      %p98 = pneg %p30
    $region23: #{tpu_custom_call.1} parent=1 // pred_check_branch
      %100 = sbr.rel (%p98) target = $region25
    $region24: #{tpu_custom_call.1} parent=1 // pred_region
      %v101 = vld [vmem:[#allocation2] sm:$0x3]
      %v102 = vld [vmem:[%s2] sm:$0x3]
      %104 = vset.pattern.permute.xlu0 0
      %105 = vperm.xlu0 %104, %v102
      %v106 = vpop.permute.xlu0 %105
      %v108 = vmul.f32 %v101, %v106
      %109 = vst.msk [vmem:[#allocation6] sm:$0x3] %vm96, %v108
    $region25: #{tpu_custom_call.1} parent=1 // pred_fallthru
      _
    // Predicated region
    $region26: #{tpu_custom_call.1} parent=1 // pred_check
      _
    $region27: #{tpu_custom_call.1} parent=1 // pred_check_branch
      %111 = sbr.rel (0) target = $region29
    $region28: #{tpu_custom_call.1} parent=1 // pred_region
      %s113 = ssub.s32 32, 32
      %114 = vsyncadd [#allocation5], %s113
      %s116 = sshll.u32 [#allocation6], 4
      %s117 = int_to_ptr.vmem [resolvable:$true] %s116
      %119 = dma.vmem_to_hbm [thread:$0]  %s117, 32, %s3, [#allocation5]
    $region29: #{tpu_custom_call.1} parent=1 // pred_fallthru
      _
    // Predicated region
    $region30: #{tpu_custom_call.1} parent=1 // pred_check
      _
    $region31: #{tpu_custom_call.1} parent=1 // pred_check_branch
      %121 = sbr.rel (0) target = $region33
    $region32: #{tpu_custom_call.1} parent=1 // pred_region
      %122 = dma.done [#allocation5], 32
    $region33: #{tpu_custom_call.1} parent=1 // pred_fallthru
      _
    %123 = vsyncpa [#allocation4], 1
    %124 = vsyncpa [#allocation5], 1

</llo_original>
